<compile_context>
chip_gen: v7x
topology: tpu7x:2x2x1
jax: 0.10.0
libtpu: 0.0.40
codegen_flags: <defaults>
</compile_context>

<pallas_src>
import jax
import jax.numpy as jnp
from jax import lax
from jax.experimental import pallas as pl
from jax.experimental.pallas import tpu as pltpu

_LANE = 128
_SUBLANE = 8


def rnn_classifier_kernel(lengths_ref, xproj_ref, whh_ref, wout_ref, bout_ref,
                          out_ref, h_sc):
    """Grid = (batch_tiles, time_chunks); time-chunk axis is the inner 'arbitrary' axis.

    lengths_ref: [tb, 1] int32
    xproj_ref:   [t_chunk, tb, Hp] bf16   pre-projected inputs (x @ W_ih + b)
    whh_ref:     [Hp, Hp] bf16
    wout_ref:    [Hp, out_pad] bf16       (lane-padded output weights)
    bout_ref:    [1, out_pad] f32         (lane-padded output bias)
    out_ref:     [tb, out_pad] f32
    h_sc:        VMEM [tb, Hp] f32        hidden state carried across time chunks
    """
    j = pl.program_id(1)
    t_chunk = xproj_ref.shape[0]

    @pl.when(j == 0)
    def _():
        h_sc[...] = jnp.zeros_like(h_sc)

    t0 = j * t_chunk
    last_t = lengths_ref[...] - 1          # [tb, 1] int32; lengths must be >= 1
    whh = whh_ref[...]                     # hoist weight load out of the loop

    def step(t, h):
        x_t = xproj_ref[t].astype(jnp.float32)                      # [tb, Hp]
        h_new = jnp.tanh(x_t + jnp.dot(h.astype(whh.dtype), whh,
                                       preferred_element_type=jnp.float32))
        # Freeze h once past the true last timestep == torch.gather(rnn_out, 0, lengths-1).
        return jnp.where((t0 + t) <= last_t, h_new, h)

    # Recurrent state lives in the loop carry (vregs) within a chunk; partial unroll
    # gives the LLO scheduler cross-step MXU/EUP/VPU visibility without blowing up
    # the instruction stream for long sequences.
    unroll = max(u for u in (8, 4, 2, 1) if t_chunk % u == 0)
    h = lax.fori_loop(0, t_chunk, step, h_sc[...], unroll=unroll)
    h_sc[...] = h                          # persist across time chunks

    # TODO(synk): dropout omitted (module constructed with dropout=None / eval mode).
    @pl.when(j == pl.num_programs(1) - 1)
    def _():
        out_ref[...] = (jnp.dot(h.astype(wout_ref.dtype), wout_ref[...],
                                preferred_element_type=jnp.float32)
                        + bout_ref[...])


def _round_up(x, m):
    return ((x + m - 1) // m) * m


def _vmem_capacity_bytes():
    try:
        return int(pltpu.get_tpu_info().vmem_capacity_bytes)
    except Exception:
        return 64 * 1024 * 1024            # conservative (v7x per-TC VMEM)


def _num_tensorcores():
    try:
        kind = jax.devices()[0].device_kind.lower()
    except Exception:
        return 1
    # v7x and v4/v5p-style megacore chips expose 2 TensorCores per device.
    if "v7" in kind or "v4" in kind or "v5p" in kind or "v5 p" in kind:
        return 2
    return 1


def _pick_time_chunk(seq_len, cap=128):
    if seq_len <= cap:
        return seq_len
    best = 1
    for d in range(1, cap + 1):
        if seq_len % d == 0:
            best = d
    return best


def _pick_batch_tile(bp, t_chunk, hp, out_pad, mm_itemsize, vmem_budget, num_tc):
    def tile_bytes(tb):
        xproj = 2 * t_chunk * tb * hp * mm_itemsize     # double-buffered input chunk
        outb = 2 * tb * out_pad * 4                     # double-buffered output block
        h_sc = tb * hp * 4                              # hidden-state scratch
        wts = 2 * (hp * hp + hp * out_pad) * mm_itemsize + 2 * out_pad * 4
        return xproj + outb + h_sc + wts

    cands = sorted((d for d in range(_SUBLANE, bp + 1, _SUBLANE) if bp % d == 0),
                   reverse=True)
    tb = cands[0]
    if num_tc > 1:                                      # keep both TensorCores busy (v7x)
        for d in cands:
            if bp // d >= num_tc:
                tb = d
                break
    fitted = None
    for d in cands:                                     # largest tile under the budget
        if d <= tb and tile_bytes(d) <= vmem_budget:
            fitted = d
            break
    if fitted is not None:
        tb = fitted
    elif tile_bytes(tb) > vmem_budget:
        tb = cands[-1]
    return tb


def rnn_classifier(sequences, lengths, params, *, batch_tile=None, time_chunk=None,
                   matmul_dtype=jnp.bfloat16):
    """Forward pass.  Input projection is plain-XLA glue in the wrapper (off the
    serial path); the recurrence, length-gather and output Linear run in-kernel."""
    emb_table, wih, whh, b, wout, bout = params
    batch, seq_len = sequences.shape
    embed_dim, hidden = wih.shape
    out_size = wout.shape[1]
    # NOTE: lengths must be >= 1 (torch.gather with index -1 is undefined anyway);
    # lengths == 0 would yield a zero final hidden here.

    hp = _round_up(hidden, _LANE)
    out_pad = _round_up(out_size, _LANE)
    bp = _round_up(batch, _SUBLANE)

    # Pad batch so every tile is a multiple of the 8-row sublane granularity.
    if bp != batch:
        sequences = jnp.concatenate(
            [sequences, jnp.zeros((bp - batch, seq_len), sequences.dtype)], axis=0)
        lengths = jnp.concatenate(
            [lengths, jnp.ones((bp - batch,), lengths.dtype)], axis=0)

    # Lane-pad hidden / output dims of all weights (inert: h0=0, tanh(0)=0,
    # padded W_out rows are zero).
    wih_p = jnp.zeros((embed_dim, hp), jnp.float32).at[:, :hidden].set(wih)
    b_p = jnp.zeros((1, hp), jnp.float32).at[:, :hidden].set(b.reshape(1, hidden))
    whh_p = (jnp.zeros((hp, hp), jnp.float32)
             .at[:hidden, :hidden].set(whh).astype(matmul_dtype))
    wout_p = (jnp.zeros((hp, out_pad), jnp.float32)
              .at[:hidden, :out_size].set(wout).astype(matmul_dtype))
    bout_p = jnp.zeros((1, out_pad), jnp.float32).at[:, :out_size].set(bout.reshape(1, -1))

    # Input projection, directly in TIME-MAJOR order (no activation transpose).
    seq_tm = sequences.T                                               # [seq_len, bp]
    vocab = emb_table.shape[0]
    if vocab <= seq_len * bp:
        # Small vocab: fuse projection into the embedding table once.
        proj_table = (emb_table @ wih_p + b_p).astype(matmul_dtype)    # [vocab, hp]
        xproj = proj_table[seq_tm]                                     # [seq_len, bp, hp]
    else:
        # Large vocab: project the gathered embeddings instead.
        emb = emb_table[seq_tm].reshape(seq_len * bp, embed_dim)
        xproj = ((emb @ wih_p + b_p)
                 .reshape(seq_len, bp, hp).astype(matmul_dtype))

    lengths2d = lengths.astype(jnp.int32).reshape(bp, 1)

    # Generation-aware VMEM budget: ~48 MiB on v7x (64 MiB/TC), ~96 MiB on v5e/v6e.
    vmem_cap = _vmem_capacity_bytes()
    vmem_budget = int(vmem_cap * 3 // 4)
    num_tc = _num_tensorcores()
    mm_itemsize = jnp.dtype(matmul_dtype).itemsize

    if time_chunk is None:
        time_chunk = _pick_time_chunk(seq_len)
    assert seq_len % time_chunk == 0
    if batch_tile is None:
        batch_tile = _pick_batch_tile(bp, time_chunk, hp, out_pad, mm_itemsize,
                                      vmem_budget, num_tc)
    assert bp % batch_tile == 0 and batch_tile % _SUBLANE == 0
    tb, tc = batch_tile, time_chunk
    grid = (bp // tb, seq_len // tc)

    out_padded = pl.pallas_call(
        rnn_classifier_kernel,
        out_shape=jax.ShapeDtypeStruct((bp, out_pad), jnp.float32),
        grid_spec=pltpu.PrefetchScalarGridSpec(
            num_scalar_prefetch=0,
            grid=grid,
            in_specs=[
                pl.BlockSpec((tb, 1), lambda i, j: (i, 0)),            # lengths
                pl.BlockSpec((tc, tb, hp), lambda i, j: (j, i, 0)),    # xproj chunk
                pl.BlockSpec((hp, hp), lambda i, j: (0, 0)),           # W_hh
                pl.BlockSpec((hp, out_pad), lambda i, j: (0, 0)),      # W_out (padded)
                pl.BlockSpec((1, out_pad), lambda i, j: (0, 0)),       # b_out (padded)
            ],
            out_specs=pl.BlockSpec((tb, out_pad), lambda i, j: (i, 0)),
            scratch_shapes=[pltpu.VMEM((tb, hp), jnp.float32)],        # hidden state
        ),
        compiler_params=pltpu.CompilerParams(
            dimension_semantics=("parallel", "arbitrary"),  # batch tiles across TCs
            vmem_limit_bytes=vmem_budget,
        ),
    )(lengths2d, xproj, whh_p, wout_p, bout_p)

    return out_padded[:batch, :out_size]


def rnn_classifier_ref(sequences, lengths, params):
    """Pure-JAX f32 reference mirroring the PyTorch forward."""
    emb_table, wih, whh, b, wout, bout = params
    batch = sequences.shape[0]
    hidden = whh.shape[0]
    emb = jnp.transpose(emb_table[sequences], (1, 0, 2))   # [seq_len, batch, embed]

    def step(h, x):
        h = jnp.tanh(x @ wih + h @ whh + b)
        return h, h

    h0 = jnp.zeros((batch, hidden), jnp.float32)
    _, hs = lax.scan(step, h0, emb)                        # [seq_len, batch, hidden]
    final = hs[lengths - 1, jnp.arange(batch)]             # gather along time dim
    return final @ wout + bout


if __name__ == "__main__":
    batch, seq_len = 8, 8
    vocab, embed_dim, hidden_dim, output_size = 32, 16, 32, 4

    key = jax.random.PRNGKey(0)
    k_seq, k_len, k_emb, k_wih, k_whh, k_b, k_wout, k_bout = jax.random.split(key, 8)

    sequences = jax.random.randint(k_seq, (batch, seq_len), 0, vocab, dtype=jnp.int32)
    lengths = jax.random.randint(k_len, (batch,), 1, seq_len + 1, dtype=jnp.int32)

    # Deterministic synthetic parameters (shapes implied by the module).
    emb_table = jax.random.normal(k_emb, (vocab, embed_dim), jnp.float32) * 0.1
    wih = jax.random.normal(k_wih, (embed_dim, hidden_dim), jnp.float32) * 0.1
    whh = jax.random.normal(k_whh, (hidden_dim, hidden_dim), jnp.float32) * 0.1
    b = jax.random.normal(k_b, (1, hidden_dim), jnp.float32) * 0.1     # b_ih + b_hh combined
    wout = jax.random.normal(k_wout, (hidden_dim, output_size), jnp.float32) * 0.1
    bout = jax.random.normal(k_bout, (1, output_size), jnp.float32) * 0.1
    params = (emb_table, wih, whh, b, wout, bout)

    out = jax.block_until_ready(rnn_classifier(sequences, lengths, params))
    ref = jax.block_until_ready(rnn_classifier_ref(sequences, lengths, params))

    assert out.shape == (batch, output_size), out.shape
    # bf16 matmul operands (f32 accumulate & f32 state) -> small deviation from f32 ref.
    assert jnp.allclose(out, ref, atol=2e-2, rtol=2e-2), (out, ref)
    print("KERNEL_OK")
</pallas_src>

<mosaic_0001>
module attributes {stable_mosaic.version = 11 : i64} {
  func.func @rnn_classifier_kernel(%arg0: i32, %arg1: i32, %arg2: memref<8x1xi32, #tpu.memory_space<vmem>>, %arg3: memref<8x8x128xbf16, #tpu.memory_space<vmem>>, %arg4: memref<128x128xbf16, #tpu.memory_space<vmem>>, %arg5: memref<128x128xbf16, #tpu.memory_space<vmem>>, %arg6: memref<1x128xf32, #tpu.memory_space<vmem>>, %arg7: memref<8x128xf32, #tpu.memory_space<vmem>>, %arg8: memref<8x128xf32, #tpu.memory_space<vmem>>) attributes {dimension_semantics = [#tpu.dimension_semantics<parallel>, #tpu.dimension_semantics<arbitrary>], iteration_bounds = array<i64: 1, 1>, scalar_prefetch = 0 : i64, scratch_operands = 1 : i64, tpu.core_type = #tpu.core_type<tc>, window_params = [{transform_indices = @transform_0, window_bounds = array<i64: 8, 1>}, {transform_indices = @transform_1, window_bounds = array<i64: 8, 8, 128>}, {pipeline_mode = #tpu.pipeline_mode<synchronous>, transform_indices = @transform_2, window_bounds = array<i64: 128, 128>}, {pipeline_mode = #tpu.pipeline_mode<synchronous>, transform_indices = @transform_3, window_bounds = array<i64: 128, 128>}, {pipeline_mode = #tpu.pipeline_mode<synchronous>, transform_indices = @transform_4, window_bounds = array<i64: 1, 128>}, {transform_indices = @transform_5, window_bounds = array<i64: 8, 128>}]} {
    %c0_i32 = arith.constant 0 : i32
    %0 = arith.cmpi eq, %arg1, %c0_i32 : i32
    %1 = arith.extui %0 : i1 to i32
    %c0_i32_0 = arith.constant 0 : i32
    %2 = arith.cmpi ne, %1, %c0_i32_0 : i32
    scf.if %2 {
      %cst_36 = arith.constant 0.000000e+00 : f32
      %125 = vector.broadcast %cst_36 : f32 to vector<8x128xf32>
      %c0_37 = arith.constant 0 : index
      %c0_38 = arith.constant 0 : index
      %126 = vector.load %arg8[%c0_37, %c0_38] : memref<8x128xf32, #tpu.memory_space<vmem>>, vector<8x128xf32>
      tpu.vector_store %arg8[%c0_37, %c0_38], %125 {strides = array<i32>} : memref<8x128xf32, #tpu.memory_space<vmem>>, vector<8x128xf32>,
    } else {
    }
    %c8_i32 = arith.constant 8 : i32
    %3 = arith.muli %arg1, %c8_i32 : i32
    %c0 = arith.constant 0 : index
    %c0_1 = arith.constant 0 : index
    %4 = vector.load %arg2[%c0, %c0_1] : memref<8x1xi32, #tpu.memory_space<vmem>>, vector<8x1xi32>
    %c1_i32 = arith.constant 1 : i32
    %5 = vector.broadcast %c1_i32 : i32 to vector<8x1xi32>
    %6 = arith.subi %4, %5 : vector<8x1xi32>
    %c0_2 = arith.constant 0 : index
    %c0_3 = arith.constant 0 : index
    %7 = vector.load %arg4[%c0_2, %c0_3] : memref<128x128xbf16, #tpu.memory_space<vmem>>, vector<128x128xbf16>
    %c0_4 = arith.constant 0 : index
    %c0_5 = arith.constant 0 : index
    %8 = vector.load %arg8[%c0_4, %c0_5] : memref<8x128xf32, #tpu.memory_space<vmem>>, vector<8x128xf32>
    %c0_i32_6 = arith.constant 0 : i32
    %9 = arith.index_cast %c0_i32_6 : i32 to index
    %c0_7 = arith.constant 0 : index
    %c0_8 = arith.constant 0 : index
    %10 = vector.load %arg3[%9, %c0_7, %c0_8] : memref<8x8x128xbf16, #tpu.memory_space<vmem>>, vector<1x8x128xbf16>
    %11 = vector.shape_cast %10 : vector<1x8x128xbf16> to vector<8x128xbf16>
    %12 = arith.extf %11 : vector<8x128xbf16> to vector<8x128xf32>
    %13 = arith.truncf %8 : vector<8x128xf32> to vector<8x128xbf16>
    %cst = arith.constant dense<0.000000e+00> : vector<8x128xf32>
    %14 = tpu.matmul %13, %7, %cst {dimension_numbers = #tpu.dot_dimension_numbers<[1], [0], [0], [1], [0, 0, 1, 1], [], []>} : vector<8x128xbf16>, vector<128x128xbf16>, vector<8x128xf32> -> vector<8x128xf32>
    %15 = arith.addf %12, %14 : vector<8x128xf32>
    %16 = math.tanh %15 : vector<8x128xf32>
    %17 = arith.addi %3, %c0_i32_6 : i32
    %18 = vector.broadcast %17 : i32 to vector<8x1xi32>
    %19 = arith.cmpi sle, %18, %6 : vector<8x1xi32>
    %20 = vector.shape_cast %19 : vector<8x1xi1> to vector<8x1xi1>
    %21 = vector.broadcast %20 : vector<8x1xi1> to vector<8x128xi1>
    %22 = arith.select %21, %16, %8 : vector<8x128xi1>, vector<8x128xf32>
    %c1_i32_9 = arith.constant 1 : i32
    %23 = arith.index_cast %c1_i32_9 : i32 to index
    %c0_10 = arith.constant 0 : index
    %c0_11 = arith.constant 0 : index
    %24 = vector.load %arg3[%23, %c0_10, %c0_11] : memref<8x8x128xbf16, #tpu.memory_space<vmem>>, vector<1x8x128xbf16>
    %25 = vector.shape_cast %24 : vector<1x8x128xbf16> to vector<8x128xbf16>
    %26 = arith.extf %25 : vector<8x128xbf16> to vector<8x128xf32>
    %27 = arith.truncf %22 : vector<8x128xf32> to vector<8x128xbf16>
    %cst_12 = arith.constant dense<0.000000e+00> : vector<8x128xf32>
    %28 = tpu.matmul %27, %7, %cst_12 {dimension_numbers = #tpu.dot_dimension_numbers<[1], [0], [0], [1], [0, 0, 1, 1], [], []>} : vector<8x128xbf16>, vector<128x128xbf16>, vector<8x128xf32> -> vector<8x128xf32>
    %29 = arith.addf %26, %28 : vector<8x128xf32>
    %30 = math.tanh %29 : vector<8x128xf32>
    %31 = arith.addi %3, %c1_i32_9 : i32
    %32 = vector.broadcast %31 : i32 to vector<8x1xi32>
    %33 = arith.cmpi sle, %32, %6 : vector<8x1xi32>
    %34 = vector.shape_cast %33 : vector<8x1xi1> to vector<8x1xi1>
    %35 = vector.broadcast %34 : vector<8x1xi1> to vector<8x128xi1>
    %36 = arith.select %35, %30, %22 : vector<8x128xi1>, vector<8x128xf32>
    %c2_i32 = arith.constant 2 : i32
    %37 = arith.index_cast %c2_i32 : i32 to index
    %c0_13 = arith.constant 0 : index
    %c0_14 = arith.constant 0 : index
    %38 = vector.load %arg3[%37, %c0_13, %c0_14] : memref<8x8x128xbf16, #tpu.memory_space<vmem>>, vector<1x8x128xbf16>
    %39 = vector.shape_cast %38 : vector<1x8x128xbf16> to vector<8x128xbf16>
    %40 = arith.extf %39 : vector<8x128xbf16> to vector<8x128xf32>
    %41 = arith.truncf %36 : vector<8x128xf32> to vector<8x128xbf16>
    %cst_15 = arith.constant dense<0.000000e+00> : vector<8x128xf32>
    %42 = tpu.matmul %41, %7, %cst_15 {dimension_numbers = #tpu.dot_dimension_numbers<[1], [0], [0], [1], [0, 0, 1, 1], [], []>} : vector<8x128xbf16>, vector<128x128xbf16>, vector<8x128xf32> -> vector<8x128xf32>
    %43 = arith.addf %40, %42 : vector<8x128xf32>
    %44 = math.tanh %43 : vector<8x128xf32>
    %45 = arith.addi %3, %c2_i32 : i32
    %46 = vector.broadcast %45 : i32 to vector<8x1xi32>
    %47 = arith.cmpi sle, %46, %6 : vector<8x1xi32>
    %48 = vector.shape_cast %47 : vector<8x1xi1> to vector<8x1xi1>
    %49 = vector.broadcast %48 : vector<8x1xi1> to vector<8x128xi1>
    %50 = arith.select %49, %44, %36 : vector<8x128xi1>, vector<8x128xf32>
    %c3_i32 = arith.constant 3 : i32
    %51 = arith.index_cast %c3_i32 : i32 to index
    %c0_16 = arith.constant 0 : index
    %c0_17 = arith.constant 0 : index
    %52 = vector.load %arg3[%51, %c0_16, %c0_17] : memref<8x8x128xbf16, #tpu.memory_space<vmem>>, vector<1x8x128xbf16>
    %53 = vector.shape_cast %52 : vector<1x8x128xbf16> to vector<8x128xbf16>
    %54 = arith.extf %53 : vector<8x128xbf16> to vector<8x128xf32>
    %55 = arith.truncf %50 : vector<8x128xf32> to vector<8x128xbf16>
    %cst_18 = arith.constant dense<0.000000e+00> : vector<8x128xf32>
    %56 = tpu.matmul %55, %7, %cst_18 {dimension_numbers = #tpu.dot_dimension_numbers<[1], [0], [0], [1], [0, 0, 1, 1], [], []>} : vector<8x128xbf16>, vector<128x128xbf16>, vector<8x128xf32> -> vector<8x128xf32>
    %57 = arith.addf %54, %56 : vector<8x128xf32>
    %58 = math.tanh %57 : vector<8x128xf32>
    %59 = arith.addi %3, %c3_i32 : i32
    %60 = vector.broadcast %59 : i32 to vector<8x1xi32>
    %61 = arith.cmpi sle, %60, %6 : vector<8x1xi32>
    %62 = vector.shape_cast %61 : vector<8x1xi1> to vector<8x1xi1>
    %63 = vector.broadcast %62 : vector<8x1xi1> to vector<8x128xi1>
    %64 = arith.select %63, %58, %50 : vector<8x128xi1>, vector<8x128xf32>
    %c4_i32 = arith.constant 4 : i32
    %65 = arith.index_cast %c4_i32 : i32 to index
    %c0_19 = arith.constant 0 : index
    %c0_20 = arith.constant 0 : index
    %66 = vector.load %arg3[%65, %c0_19, %c0_20] : memref<8x8x128xbf16, #tpu.memory_space<vmem>>, vector<1x8x128xbf16>
    %67 = vector.shape_cast %66 : vector<1x8x128xbf16> to vector<8x128xbf16>
    %68 = arith.extf %67 : vector<8x128xbf16> to vector<8x128xf32>
    %69 = arith.truncf %64 : vector<8x128xf32> to vector<8x128xbf16>
    %cst_21 = arith.constant dense<0.000000e+00> : vector<8x128xf32>
    %70 = tpu.matmul %69, %7, %cst_21 {dimension_numbers = #tpu.dot_dimension_numbers<[1], [0], [0], [1], [0, 0, 1, 1], [], []>} : vector<8x128xbf16>, vector<128x128xbf16>, vector<8x128xf32> -> vector<8x128xf32>
    %71 = arith.addf %68, %70 : vector<8x128xf32>
    %72 = math.tanh %71 : vector<8x128xf32>
    %73 = arith.addi %3, %c4_i32 : i32
    %74 = vector.broadcast %73 : i32 to vector<8x1xi32>
    %75 = arith.cmpi sle, %74, %6 : vector<8x1xi32>
    %76 = vector.shape_cast %75 : vector<8x1xi1> to vector<8x1xi1>
    %77 = vector.broadcast %76 : vector<8x1xi1> to vector<8x128xi1>
    %78 = arith.select %77, %72, %64 : vector<8x128xi1>, vector<8x128xf32>
    %c5_i32 = arith.constant 5 : i32
    %79 = arith.index_cast %c5_i32 : i32 to index
    %c0_22 = arith.constant 0 : index
    %c0_23 = arith.constant 0 : index
    %80 = vector.load %arg3[%79, %c0_22, %c0_23] : memref<8x8x128xbf16, #tpu.memory_space<vmem>>, vector<1x8x128xbf16>
    %81 = vector.shape_cast %80 : vector<1x8x128xbf16> to vector<8x128xbf16>
    %82 = arith.extf %81 : vector<8x128xbf16> to vector<8x128xf32>
    %83 = arith.truncf %78 : vector<8x128xf32> to vector<8x128xbf16>
    %cst_24 = arith.constant dense<0.000000e+00> : vector<8x128xf32>
    %84 = tpu.matmul %83, %7, %cst_24 {dimension_numbers = #tpu.dot_dimension_numbers<[1], [0], [0], [1], [0, 0, 1, 1], [], []>} : vector<8x128xbf16>, vector<128x128xbf16>, vector<8x128xf32> -> vector<8x128xf32>
    %85 = arith.addf %82, %84 : vector<8x128xf32>
    %86 = math.tanh %85 : vector<8x128xf32>
    %87 = arith.addi %3, %c5_i32 : i32
    %88 = vector.broadcast %87 : i32 to vector<8x1xi32>
    %89 = arith.cmpi sle, %88, %6 : vector<8x1xi32>
    %90 = vector.shape_cast %89 : vector<8x1xi1> to vector<8x1xi1>
    %91 = vector.broadcast %90 : vector<8x1xi1> to vector<8x128xi1>
    %92 = arith.select %91, %86, %78 : vector<8x128xi1>, vector<8x128xf32>
    %c6_i32 = arith.constant 6 : i32
    %93 = arith.index_cast %c6_i32 : i32 to index
    %c0_25 = arith.constant 0 : index
    %c0_26 = arith.constant 0 : index
    %94 = vector.load %arg3[%93, %c0_25, %c0_26] : memref<8x8x128xbf16, #tpu.memory_space<vmem>>, vector<1x8x128xbf16>
    %95 = vector.shape_cast %94 : vector<1x8x128xbf16> to vector<8x128xbf16>
    %96 = arith.extf %95 : vector<8x128xbf16> to vector<8x128xf32>
    %97 = arith.truncf %92 : vector<8x128xf32> to vector<8x128xbf16>
    %cst_27 = arith.constant dense<0.000000e+00> : vector<8x128xf32>
    %98 = tpu.matmul %97, %7, %cst_27 {dimension_numbers = #tpu.dot_dimension_numbers<[1], [0], [0], [1], [0, 0, 1, 1], [], []>} : vector<8x128xbf16>, vector<128x128xbf16>, vector<8x128xf32> -> vector<8x128xf32>
    %99 = arith.addf %96, %98 : vector<8x128xf32>
    %100 = math.tanh %99 : vector<8x128xf32>
    %101 = arith.addi %3, %c6_i32 : i32
    %102 = vector.broadcast %101 : i32 to vector<8x1xi32>
    %103 = arith.cmpi sle, %102, %6 : vector<8x1xi32>
    %104 = vector.shape_cast %103 : vector<8x1xi1> to vector<8x1xi1>
    %105 = vector.broadcast %104 : vector<8x1xi1> to vector<8x128xi1>
    %106 = arith.select %105, %100, %92 : vector<8x128xi1>, vector<8x128xf32>
    %c7_i32 = arith.constant 7 : i32
    %107 = arith.index_cast %c7_i32 : i32 to index
    %c0_28 = arith.constant 0 : index
    %c0_29 = arith.constant 0 : index
    %108 = vector.load %arg3[%107, %c0_28, %c0_29] : memref<8x8x128xbf16, #tpu.memory_space<vmem>>, vector<1x8x128xbf16>
    %109 = vector.shape_cast %108 : vector<1x8x128xbf16> to vector<8x128xbf16>
    %110 = arith.extf %109 : vector<8x128xbf16> to vector<8x128xf32>
    %111 = arith.truncf %106 : vector<8x128xf32> to vector<8x128xbf16>
    %cst_30 = arith.constant dense<0.000000e+00> : vector<8x128xf32>
    %112 = tpu.matmul %111, %7, %cst_30 {dimension_numbers = #tpu.dot_dimension_numbers<[1], [0], [0], [1], [0, 0, 1, 1], [], []>} : vector<8x128xbf16>, vector<128x128xbf16>, vector<8x128xf32> -> vector<8x128xf32>
    %113 = arith.addf %110, %112 : vector<8x128xf32>
    %114 = math.tanh %113 : vector<8x128xf32>
    %115 = arith.addi %3, %c7_i32 : i32
    %116 = vector.broadcast %115 : i32 to vector<8x1xi32>
    %117 = arith.cmpi sle, %116, %6 : vector<8x1xi32>
    %118 = vector.shape_cast %117 : vector<8x1xi1> to vector<8x1xi1>
    %119 = vector.broadcast %118 : vector<8x1xi1> to vector<8x128xi1>
    %120 = arith.select %119, %114, %106 : vector<8x128xi1>, vector<8x128xf32>
    %c8_i32_31 = arith.constant 8 : i32
    %c0_32 = arith.constant 0 : index
    %c0_33 = arith.constant 0 : index
    %121 = vector.load %arg8[%c0_32, %c0_33] : memref<8x128xf32, #tpu.memory_space<vmem>>, vector<8x128xf32>
    tpu.vector_store %arg8[%c0_32, %c0_33], %120 {strides = array<i32>} : memref<8x128xf32, #tpu.memory_space<vmem>>, vector<8x128xf32>,
    %c0_i32_34 = arith.constant 0 : i32
    %122 = arith.cmpi eq, %arg1, %c0_i32_34 : i32
    %123 = arith.extui %122 : i1 to i32
    %c0_i32_35 = arith.constant 0 : i32
    %124 = arith.cmpi ne, %123, %c0_i32_35 : i32
    scf.if %124 {
      %125 = arith.truncf %120 : vector<8x128xf32> to vector<8x128xbf16>
      %c0_36 = arith.constant 0 : index
      %c0_37 = arith.constant 0 : index
      %126 = vector.load %arg5[%c0_36, %c0_37] : memref<128x128xbf16, #tpu.memory_space<vmem>>, vector<128x128xbf16>
      %cst_38 = arith.constant dense<0.000000e+00> : vector<8x128xf32>
      %127 = tpu.matmul %125, %126, %cst_38 {dimension_numbers = #tpu.dot_dimension_numbers<[1], [0], [0], [1], [0, 0, 1, 1], [], []>} : vector<8x128xbf16>, vector<128x128xbf16>, vector<8x128xf32> -> vector<8x128xf32>
      %c0_39 = arith.constant 0 : index
      %c0_40 = arith.constant 0 : index
      %128 = vector.load %arg6[%c0_39, %c0_40] : memref<1x128xf32, #tpu.memory_space<vmem>>, vector<1x128xf32>
      %129 = vector.broadcast %128 : vector<1x128xf32> to vector<8x128xf32>
      %130 = arith.addf %127, %129 : vector<8x128xf32>
      %c0_41 = arith.constant 0 : index
      %c0_42 = arith.constant 0 : index
      %131 = vector.load %arg7[%c0_41, %c0_42] : memref<8x128xf32, #tpu.memory_space<vmem>>, vector<8x128xf32>
      tpu.vector_store %arg7[%c0_41, %c0_42], %130 {strides = array<i32>} : memref<8x128xf32, #tpu.memory_space<vmem>>, vector<8x128xf32>,
    } else {
    }
    return
  }
  func.func @transform_0(%arg0: i32, %arg1: i32) -> (i32, i32) {
    %c0_i32 = arith.constant 0 : i32
    %c0_i32_0 = arith.constant 0 : i32
    return %arg0, %c0_i32 : i32, i32
  }
  func.func @transform_1(%arg0: i32, %arg1: i32) -> (i32, i32, i32) {
    %c0_i32 = arith.constant 0 : i32
    %c0_i32_0 = arith.constant 0 : i32
    return %arg1, %arg0, %c0_i32 : i32, i32, i32
  }
  func.func @transform_2(%arg0: i32, %arg1: i32) -> (i32, i32) {
    %c0_i32 = arith.constant 0 : i32
    %c0_i32_0 = arith.constant 0 : i32
    %c0_i32_1 = arith.constant 0 : i32
    return %c0_i32, %c0_i32_0 : i32, i32
  }
  func.func @transform_3(%arg0: i32, %arg1: i32) -> (i32, i32) {
    %c0_i32 = arith.constant 0 : i32
    %c0_i32_0 = arith.constant 0 : i32
    %c0_i32_1 = arith.constant 0 : i32
    return %c0_i32, %c0_i32_0 : i32, i32
  }
  func.func @transform_4(%arg0: i32, %arg1: i32) -> (i32, i32) {
    %c0_i32 = arith.constant 0 : i32
    %c0_i32_0 = arith.constant 0 : i32
    %c0_i32_1 = arith.constant 0 : i32
    return %c0_i32, %c0_i32_0 : i32, i32
  }
  func.func @transform_5(%arg0: i32, %arg1: i32) -> (i32, i32) {
    %c0_i32 = arith.constant 0 : i32
    %c0_i32_0 = arith.constant 0 : i32
    return %arg0, %c0_i32 : i32, i32
  }
}

</mosaic_0001>

<llo_original>
// kernel: tpu_custom_call.1
$region0: #{tpu_custom_call.1}
  #allocation0 [shape = 'u32[]', space=smem, size = 0x4, offset = 0x4, fixed_abs, tag = 'smem constant byte address 0x4 - core index']
  #allocation1 [shape = 'u32[144,128]{1,0:T(1,128)}', space=vmem, size = 0x12000, scoped, tag = 'internal scratch']
  #allocation2 [shape = 'f32[8,128]{1,0:T(8,128)}', space=vmem, size = 0x1000, scoped, tag = 'scratch operand']
  %s0 = inlined_call_operand.vmem [shape: s32[8,1], index: 0, kind: input, shape index: {}]
  %s1 = inlined_call_operand.hbm [shape: bf16[8,8,128], index: 1, kind: input, shape index: {}]
  %s2 = inlined_call_operand.hbm [shape: bf16[128,128], index: 2, kind: input, shape index: {}]
  %s3 = inlined_call_operand.hbm [shape: bf16[128,128], index: 3, kind: input, shape index: {}]
  %s4 = inlined_call_operand.vmem [shape: f32[1,128], index: 4, kind: input, shape index: {}]
  %s5 = inlined_call_operand.hbm [shape: f32[8,128], index: 5, kind: output, shape index: {}]
  %s6 = sld [smem:[#allocation0]]
  $region50: #{tpu_custom_call.1} parent=0
    _
  %s8 = ssub.s32 1, %s6
  %s9 = scalar_select 0, %s8, %s6
  $region1: #{tpu_custom_call.1} parent=0
    #allocation3 [shape = 'u8[16384]{0}', space=vmem, size = 0x4000, scoped, tag = 'input window, operand 1, single buffered']
    #allocation4 [shape = 's32[1]{0}', space=sflag, size = 0x4, scoped, tag = 'scoped memory for tpu_custom_call.1']
    #allocation5 [shape = 's32[1]{0}', space=sflag, size = 0x4, scoped, tag = 'scoped memory for tpu_custom_call.1']
    #allocation6 [shape = 'u8[32768]{0}', space=vmem, size = 0x8000, scoped, tag = 'input window, operand 2, single buffered']
    #allocation7 [shape = 's32[1]{0}', space=sflag, size = 0x4, scoped, tag = 'scoped memory for tpu_custom_call.1']
    #allocation8 [shape = 'u8[32768]{0}', space=vmem, size = 0x8000, scoped, tag = 'input window, operand 3, single buffered']
    #allocation9 [shape = 'u8[4096]{0}', space=vmem, size = 0x1000, scoped, tag = 'output window, operand 0, single buffered']
    %10 = vsyncpa [#allocation4], 0
    %11 = vsyncpa [#allocation7], 0
    %12 = vsyncpa [#allocation5], 0
    // Predicated region
    $region2: #{tpu_custom_call.1} parent=1 // pred_check
      _
    $region3: #{tpu_custom_call.1} parent=1 // pred_check_branch
      %14 = sbr.rel (0) target = $region5
    $region4: #{tpu_custom_call.1} parent=1 // pred_region
      _
    $region5: #{tpu_custom_call.1} parent=1 // pred_fallthru
      _
    // Predicated region
    $region6: #{tpu_custom_call.1} parent=1 // pred_check
      _
    $region7: #{tpu_custom_call.1} parent=1 // pred_check_branch
      %16 = sbr.rel (0) target = $region9
    $region8: #{tpu_custom_call.1} parent=1 // pred_region
      %s18 = ssub.s32 512, 512
      %19 = vsyncadd [#allocation4], %s18
      %s20 = sshll.u32 [#allocation3], 4
      %s21 = int_to_ptr.vmem [resolvable:$true] %s20
      %26 = dma.hbm_to_vmem [thread:$0]  %s1, 512, %s21, [#allocation4], 64, 64, 4
    $region9: #{tpu_custom_call.1} parent=1 // pred_fallthru
      _
    // Predicated region
    $region10: #{tpu_custom_call.1} parent=1 // pred_check
      _
    $region11: #{tpu_custom_call.1} parent=1 // pred_check_branch
      %28 = sbr.rel (0) target = $region13
    $region12: #{tpu_custom_call.1} parent=1 // pred_region
      %s30 = ssub.s32 1024, 1024
      %31 = vsyncadd [#allocation7], %s30
      %s32 = sshll.u32 [#allocation6], 4
      %s33 = int_to_ptr.vmem [resolvable:$true] %s32
      %38 = dma.hbm_to_vmem [thread:$0]  %s2, 1024, %s33, [#allocation7], 64, 64, 4
    $region13: #{tpu_custom_call.1} parent=1 // pred_fallthru
      _
    // Predicated region
    $region14: #{tpu_custom_call.1} parent=1 // pred_check
      _
    $region15: #{tpu_custom_call.1} parent=1 // pred_check_branch
      %40 = sbr.rel (0) target = $region17
    $region16: #{tpu_custom_call.1} parent=1 // pred_region
      %s42 = ssub.s32 1024, 1024
      %43 = vsyncadd [#allocation7], %s42
      %s44 = sshll.u32 [#allocation8], 4
      %s45 = int_to_ptr.vmem [resolvable:$true] %s44
      %50 = dma.hbm_to_vmem [thread:$0]  %s3, 1024, %s45, [#allocation7], 64, 64, 4
    $region17: #{tpu_custom_call.1} parent=1 // pred_fallthru
      _
    // Predicated region
    $region18: #{tpu_custom_call.1} parent=1 // pred_check
      _
    $region19: #{tpu_custom_call.1} parent=1 // pred_check_branch
      %52 = sbr.rel (0) target = $region21
    $region20: #{tpu_custom_call.1} parent=1 // pred_region
      _
    $region21: #{tpu_custom_call.1} parent=1 // pred_fallthru
      _
    // Predicated region
    $region22: #{tpu_custom_call.1} parent=1 // pred_check
      _
    $region23: #{tpu_custom_call.1} parent=1 // pred_check_branch
      %54 = sbr.rel (0) target = $region25
    $region24: #{tpu_custom_call.1} parent=1 // pred_region
      %55 = dma.done [#allocation4], 512
    $region25: #{tpu_custom_call.1} parent=1 // pred_fallthru
      _
    // Predicated region
    $region26: #{tpu_custom_call.1} parent=1 // pred_check
      _
    $region27: #{tpu_custom_call.1} parent=1 // pred_check_branch
      %57 = sbr.rel (0) target = $region29
    $region28: #{tpu_custom_call.1} parent=1 // pred_region
      %58 = dma.done [#allocation7], 1024
    $region29: #{tpu_custom_call.1} parent=1 // pred_fallthru
      _
    // Predicated region
    $region30: #{tpu_custom_call.1} parent=1 // pred_check
      _
    $region31: #{tpu_custom_call.1} parent=1 // pred_check_branch
      %60 = sbr.rel (0) target = $region33
    $region32: #{tpu_custom_call.1} parent=1 // pred_region
      %61 = dma.done [#allocation7], 1024
    $region33: #{tpu_custom_call.1} parent=1 // pred_fallthru
      _
    %p63 = scmp.eq.s32.totalorder 0, 0
    // Predicated region
    $region34: #{tpu_custom_call.1} parent=1 // pred_check
      %p64 = pneg %p63
    $region35: #{tpu_custom_call.1} parent=1 // pred_check_branch
      %66 = sbr.rel (%p64) target = $region37
    $region36: #{tpu_custom_call.1} parent=1 // pred_region
      %67 = vst [vmem:[#allocation2] sm:$0xff] 0.0
    $region37: #{tpu_custom_call.1} parent=1 // pred_fallthru
      _
    %s68 = smul.u32 0, 8
    %v69 = vld [vmem:[%s0] sm:$0xff]
    %v70 = vsub.s32 %v69, 1
    %v71 = vld [vmem:[#allocation6] sm:$0xf]
    %v72 = vld [vmem:[#allocation6 + $0x4] sm:$0xf]
    %v73 = vld [vmem:[#allocation6 + $0x8] sm:$0xf]
    %v74 = vld [vmem:[#allocation6 + $0xc] sm:$0xf]
    %v75 = vld [vmem:[#allocation6 + $0x10] sm:$0xf]
    %v76 = vld [vmem:[#allocation6 + $0x14] sm:$0xf]
    %v77 = vld [vmem:[#allocation6 + $0x18] sm:$0xf]
    %v78 = vld [vmem:[#allocation6 + $0x1c] sm:$0xf]
    %v79 = vld [vmem:[#allocation6 + $0x20] sm:$0xf]
    %v80 = vld [vmem:[#allocation6 + $0x24] sm:$0xf]
    %v81 = vld [vmem:[#allocation6 + $0x28] sm:$0xf]
    %v82 = vld [vmem:[#allocation6 + $0x2c] sm:$0xf]
    %v83 = vld [vmem:[#allocation6 + $0x30] sm:$0xf]
    %v84 = vld [vmem:[#allocation6 + $0x34] sm:$0xf]
    %v85 = vld [vmem:[#allocation6 + $0x38] sm:$0xf]
    %v86 = vld [vmem:[#allocation6 + $0x3c] sm:$0xf]
    %v87 = vld [vmem:[#allocation2] sm:$0xff]
    %v88 = vld [vmem:[#allocation3] sm:$0xf]
    %v89 = vunpack.c.l.bf16 %v88
    %v90 = vpack.c.bf16 %v87, %v87
    %v107 = vunpack.c.l.b16 %v71
    %v108 = vunpack.c.l.b16 %v72
    %v109 = vunpack.c.l.b16 %v73
    %v110 = vunpack.c.l.b16 %v74
    %v111 = vunpack.c.l.b16 %v75
    %v112 = vunpack.c.l.b16 %v76
    %v113 = vunpack.c.l.b16 %v77
    %v114 = vunpack.c.l.b16 %v78
    %v115 = vunpack.c.l.b16 %v79
    %v116 = vunpack.c.l.b16 %v80
    %v117 = vunpack.c.l.b16 %v81
    %v118 = vunpack.c.l.b16 %v82
    %v119 = vunpack.c.l.b16 %v83
    %v120 = vunpack.c.l.b16 %v84
    %v121 = vunpack.c.l.b16 %v85
    %v122 = vunpack.c.l.b16 %v86
    %v123 = vpack.c.b16 %v108, %v107
    %v124 = vpack.c.b16 %v110, %v109
    %v125 = vpack.c.b16 %v112, %v111
    %v126 = vpack.c.b16 %v114, %v113
    %v127 = vpack.c.b16 %v116, %v115
    %v128 = vpack.c.b16 %v118, %v117
    %v129 = vpack.c.b16 %v120, %v119
    %v130 = vpack.c.b16 %v122, %v121
    %139 = vmatprep.subr.bf16.mxu0 0
    %140 = vmatpush1.bf16.msra.mxu0 %v123
    %141 = vmatprep.subr.bf16.mxu0 0
    %142 = vmatpush1.bf16.msra.mxu0 %v124
    %143 = vmatprep.subr.bf16.mxu0 0
    %144 = vmatpush1.bf16.msra.mxu0 %v125
    %145 = vmatprep.subr.bf16.mxu0 0
    %146 = vmatpush1.bf16.msra.mxu0 %v126
    %147 = vmatprep.subr.bf16.mxu0 0
    %148 = vmatpush1.bf16.msra.mxu0 %v127
    %149 = vmatprep.subr.bf16.mxu0 0
    %150 = vmatpush1.bf16.msra.mxu0 %v128
    %151 = vmatprep.subr.bf16.mxu0 0
    %152 = vmatpush1.bf16.msra.mxu0 %v129
    %153 = vmatprep.subr.bf16.mxu0 0
    %154 = vmatpush1.bf16.msra.mxu0 %v130
    %155 = vmatprep.subr.bf16.mxu0 0
    %156 = vmatpush1.bf16.msra.mxu0 0
    %157 = vmatprep.subr.bf16.mxu0 0
    %158 = vmatpush1.bf16.msra.mxu0 0
    %159 = vmatprep.subr.bf16.mxu0 0
    %160 = vmatpush1.bf16.msra.mxu0 0
    %161 = vmatprep.subr.bf16.mxu0 0
    %162 = vmatpush1.bf16.msra.mxu0 0
    %163 = vmatprep.subr.bf16.mxu0 0
    %164 = vmatpush1.bf16.msra.mxu0 0
    %165 = vmatprep.subr.bf16.mxu0 0
    %166 = vmatpush1.bf16.msra.mxu0 0
    %167 = vmatprep.subr.bf16.mxu0 0
    %168 = vmatpush1.bf16.msra.mxu0 0
    %169 = vmatprep.subr.bf16.mxu0 0
    %170 = vmatpush1.bf16.msra.mxu0 0
    %171 = vmatprep.mubr.bf16.mxu0 0
    %172 = vmatmul.mubr.bf16.gmra.mrb[0].mxu0 %v90
    %v173 = vpop.f32.mrb[0].mxu0
    %v174 = vadd.f32 0.0, %v173
    %v175 = vpop.f32.mrb[0].mxu0
    %v176 = vpop.f32.mrb[0].mxu0
    %v177 = vpop.f32.mrb[0].mxu0
    %178 = vdwg.mxu0
    %v179 = vadd.f32 %v89, %v174
    %v180 = vtanh.pop %v179
    %v181 = vstv %s68
    %vm182 = vcmp.le.s32.totalorder %v181, %v70
    %v183 = vsel %vm182, 1, 0
    %184 = vset.pattern.permute.xlu0 0
    %185 = vperm.xlu0 %184, %v183
    %v186 = vpop.permute.xlu0 %185
    %vm187 = vcmp.eq.s32.totalorder %v186, 1
    %v188 = vsel %vm187, %v180, %v87
    %s189 = scalar_lea.vmem [#allocation3], 4
    %v190 = vld [vmem:[%s189] sm:$0xf]
    %v191 = vunpack.c.l.bf16 %v190
    %v192 = vpack.c.bf16 %v188, %v188
    %193 = vmatprep.subr.bf16.mxu0 0
    %194 = vmatpush1.bf16.msra.mxu0 %v123
    %195 = vmatprep.subr.bf16.mxu0 0
    %196 = vmatpush1.bf16.msra.mxu0 %v124
    %197 = vmatprep.subr.bf16.mxu0 0
    %198 = vmatpush1.bf16.msra.mxu0 %v125
    %199 = vmatprep.subr.bf16.mxu0 0
    %200 = vmatpush1.bf16.msra.mxu0 %v126
    %201 = vmatprep.subr.bf16.mxu0 0
    %202 = vmatpush1.bf16.msra.mxu0 %v127
    %203 = vmatprep.subr.bf16.mxu0 0
    %204 = vmatpush1.bf16.msra.mxu0 %v128
    %205 = vmatprep.subr.bf16.mxu0 0
    %206 = vmatpush1.bf16.msra.mxu0 %v129
    %207 = vmatprep.subr.bf16.mxu0 0
    %208 = vmatpush1.bf16.msra.mxu0 %v130
    %209 = vmatprep.subr.bf16.mxu0 0
    %210 = vmatpush1.bf16.msra.mxu0 0
    %211 = vmatprep.subr.bf16.mxu0 0
    %212 = vmatpush1.bf16.msra.mxu0 0
    %213 = vmatprep.subr.bf16.mxu0 0
    %214 = vmatpush1.bf16.msra.mxu0 0
    %215 = vmatprep.subr.bf16.mxu0 0
    %216 = vmatpush1.bf16.msra.mxu0 0
    %217 = vmatprep.subr.bf16.mxu0 0
    %218 = vmatpush1.bf16.msra.mxu0 0
    %219 = vmatprep.subr.bf16.mxu0 0
    %220 = vmatpush1.bf16.msra.mxu0 0
    %221 = vmatprep.subr.bf16.mxu0 0
    %222 = vmatpush1.bf16.msra.mxu0 0
    %223 = vmatprep.subr.bf16.mxu0 0
    %224 = vmatpush1.bf16.msra.mxu0 0
    %225 = vmatprep.mubr.bf16.mxu0 0
    %226 = vmatmul.mubr.bf16.gmra.mrb[0].mxu0 %v192
    %v227 = vpop.f32.mrb[0].mxu0
    %v228 = vadd.f32 0.0, %v227
    %v229 = vpop.f32.mrb[0].mxu0
    %v230 = vpop.f32.mrb[0].mxu0
    %v231 = vpop.f32.mrb[0].mxu0
    %232 = vdwg.mxu0
    %v233 = vadd.f32 %v191, %v228
    %v234 = vtanh.pop %v233
    %s235 = sadd.s32 %s68, 1
    %v236 = vstv %s235
    %vm237 = vcmp.le.s32.totalorder %v236, %v70
    %v238 = vsel %vm237, 1, 0
    %239 = vset.pattern.permute.xlu0 0
    %240 = vperm.xlu0 %239, %v238
    %v241 = vpop.permute.xlu0 %240
    %vm242 = vcmp.eq.s32.totalorder %v241, 1
    %v243 = vsel %vm242, %v234, %v188
    %s244 = scalar_lea.vmem [#allocation3], 8
    %v245 = vld [vmem:[%s244] sm:$0xf]
    %v246 = vunpack.c.l.bf16 %v245
    %v247 = vpack.c.bf16 %v243, %v243
    %248 = vmatprep.subr.bf16.mxu0 0
    %249 = vmatpush1.bf16.msra.mxu0 %v123
    %250 = vmatprep.subr.bf16.mxu0 0
    %251 = vmatpush1.bf16.msra.mxu0 %v124
    %252 = vmatprep.subr.bf16.mxu0 0
    %253 = vmatpush1.bf16.msra.mxu0 %v125
    %254 = vmatprep.subr.bf16.mxu0 0
    %255 = vmatpush1.bf16.msra.mxu0 %v126
    %256 = vmatprep.subr.bf16.mxu0 0
    %257 = vmatpush1.bf16.msra.mxu0 %v127
    %258 = vmatprep.subr.bf16.mxu0 0
    %259 = vmatpush1.bf16.msra.mxu0 %v128
    %260 = vmatprep.subr.bf16.mxu0 0
    %261 = vmatpush1.bf16.msra.mxu0 %v129
    %262 = vmatprep.subr.bf16.mxu0 0
    %263 = vmatpush1.bf16.msra.mxu0 %v130
    %264 = vmatprep.subr.bf16.mxu0 0
    %265 = vmatpush1.bf16.msra.mxu0 0
    %266 = vmatprep.subr.bf16.mxu0 0
    %267 = vmatpush1.bf16.msra.mxu0 0
    %268 = vmatprep.subr.bf16.mxu0 0
    %269 = vmatpush1.bf16.msra.mxu0 0
    %270 = vmatprep.subr.bf16.mxu0 0
    %271 = vmatpush1.bf16.msra.mxu0 0
    %272 = vmatprep.subr.bf16.mxu0 0
    %273 = vmatpush1.bf16.msra.mxu0 0
    %274 = vmatprep.subr.bf16.mxu0 0
    %275 = vmatpush1.bf16.msra.mxu0 0
    %276 = vmatprep.subr.bf16.mxu0 0
    %277 = vmatpush1.bf16.msra.mxu0 0
    %278 = vmatprep.subr.bf16.mxu0 0
    %279 = vmatpush1.bf16.msra.mxu0 0
    %280 = vmatprep.mubr.bf16.mxu0 0
    %281 = vmatmul.mubr.bf16.gmra.mrb[0].mxu0 %v247
    %v282 = vpop.f32.mrb[0].mxu0
    %v283 = vadd.f32 0.0, %v282
    %v284 = vpop.f32.mrb[0].mxu0
    %v285 = vpop.f32.mrb[0].mxu0
    %v286 = vpop.f32.mrb[0].mxu0
    %287 = vdwg.mxu0
    %v288 = vadd.f32 %v246, %v283
    %v289 = vtanh.pop %v288
    %s290 = sadd.s32 %s68, 2
    %v291 = vstv %s290
    %vm292 = vcmp.le.s32.totalorder %v291, %v70
    %v293 = vsel %vm292, 1, 0
    %294 = vset.pattern.permute.xlu0 0
    %295 = vperm.xlu0 %294, %v293
    %v296 = vpop.permute.xlu0 %295
    %vm297 = vcmp.eq.s32.totalorder %v296, 1
    %v298 = vsel %vm297, %v289, %v243
    %s299 = scalar_lea.vmem [#allocation3], 12
    %v300 = vld [vmem:[%s299] sm:$0xf]
    %v301 = vunpack.c.l.bf16 %v300
    %v302 = vpack.c.bf16 %v298, %v298
    %303 = vmatprep.subr.bf16.mxu0 0
    %304 = vmatpush1.bf16.msra.mxu0 %v123
    %305 = vmatprep.subr.bf16.mxu0 0
    %306 = vmatpush1.bf16.msra.mxu0 %v124
    %307 = vmatprep.subr.bf16.mxu0 0
    %308 = vmatpush1.bf16.msra.mxu0 %v125
    %309 = vmatprep.subr.bf16.mxu0 0
    %310 = vmatpush1.bf16.msra.mxu0 %v126
    %311 = vmatprep.subr.bf16.mxu0 0
    %312 = vmatpush1.bf16.msra.mxu0 %v127
    %313 = vmatprep.subr.bf16.mxu0 0
    %314 = vmatpush1.bf16.msra.mxu0 %v128
    %315 = vmatprep.subr.bf16.mxu0 0
    %316 = vmatpush1.bf16.msra.mxu0 %v129
    %317 = vmatprep.subr.bf16.mxu0 0
    %318 = vmatpush1.bf16.msra.mxu0 %v130
    %319 = vmatprep.subr.bf16.mxu0 0
    %320 = vmatpush1.bf16.msra.mxu0 0
    %321 = vmatprep.subr.bf16.mxu0 0
    %322 = vmatpush1.bf16.msra.mxu0 0
    %323 = vmatprep.subr.bf16.mxu0 0
    %324 = vmatpush1.bf16.msra.mxu0 0
    %325 = vmatprep.subr.bf16.mxu0 0
    %326 = vmatpush1.bf16.msra.mxu0 0
    %327 = vmatprep.subr.bf16.mxu0 0
    %328 = vmatpush1.bf16.msra.mxu0 0
    %329 = vmatprep.subr.bf16.mxu0 0
    %330 = vmatpush1.bf16.msra.mxu0 0
    %331 = vmatprep.subr.bf16.mxu0 0
    %332 = vmatpush1.bf16.msra.mxu0 0
    %333 = vmatprep.subr.bf16.mxu0 0
    %334 = vmatpush1.bf16.msra.mxu0 0
    %335 = vmatprep.mubr.bf16.mxu0 0
    %336 = vmatmul.mubr.bf16.gmra.mrb[0].mxu0 %v302
    %v337 = vpop.f32.mrb[0].mxu0
    %v338 = vadd.f32 0.0, %v337
    %v339 = vpop.f32.mrb[0].mxu0
    %v340 = vpop.f32.mrb[0].mxu0
    %v341 = vpop.f32.mrb[0].mxu0
    %342 = vdwg.mxu0
    %v343 = vadd.f32 %v301, %v338
    %v344 = vtanh.pop %v343
    %s345 = sadd.s32 %s68, 3
    %v346 = vstv %s345
    %vm347 = vcmp.le.s32.totalorder %v346, %v70
    %v348 = vsel %vm347, 1, 0
    %349 = vset.pattern.permute.xlu0 0
    %350 = vperm.xlu0 %349, %v348
    %v351 = vpop.permute.xlu0 %350
    %vm352 = vcmp.eq.s32.totalorder %v351, 1
    %v353 = vsel %vm352, %v344, %v298
    %s354 = scalar_lea.vmem [#allocation3], 16
    %v355 = vld [vmem:[%s354] sm:$0xf]
    %v356 = vunpack.c.l.bf16 %v355
    %v357 = vpack.c.bf16 %v353, %v353
    %358 = vmatprep.subr.bf16.mxu0 0
    %359 = vmatpush1.bf16.msra.mxu0 %v123
    %360 = vmatprep.subr.bf16.mxu0 0
    %361 = vmatpush1.bf16.msra.mxu0 %v124
    %362 = vmatprep.subr.bf16.mxu0 0
    %363 = vmatpush1.bf16.msra.mxu0 %v125
    %364 = vmatprep.subr.bf16.mxu0 0
    %365 = vmatpush1.bf16.msra.mxu0 %v126
    %366 = vmatprep.subr.bf16.mxu0 0
    %367 = vmatpush1.bf16.msra.mxu0 %v127
    %368 = vmatprep.subr.bf16.mxu0 0
    %369 = vmatpush1.bf16.msra.mxu0 %v128
    %370 = vmatprep.subr.bf16.mxu0 0
    %371 = vmatpush1.bf16.msra.mxu0 %v129
    %372 = vmatprep.subr.bf16.mxu0 0
    %373 = vmatpush1.bf16.msra.mxu0 %v130
    %374 = vmatprep.subr.bf16.mxu0 0
    %375 = vmatpush1.bf16.msra.mxu0 0
    %376 = vmatprep.subr.bf16.mxu0 0
    %377 = vmatpush1.bf16.msra.mxu0 0
    %378 = vmatprep.subr.bf16.mxu0 0
    %379 = vmatpush1.bf16.msra.mxu0 0
    %380 = vmatprep.subr.bf16.mxu0 0
    %381 = vmatpush1.bf16.msra.mxu0 0
    %382 = vmatprep.subr.bf16.mxu0 0
    %383 = vmatpush1.bf16.msra.mxu0 0
    %384 = vmatprep.subr.bf16.mxu0 0
    %385 = vmatpush1.bf16.msra.mxu0 0
    %386 = vmatprep.subr.bf16.mxu0 0
    %387 = vmatpush1.bf16.msra.mxu0 0
    %388 = vmatprep.subr.bf16.mxu0 0
    %389 = vmatpush1.bf16.msra.mxu0 0
    %390 = vmatprep.mubr.bf16.mxu0 0
    %391 = vmatmul.mubr.bf16.gmra.mrb[0].mxu0 %v357
    %v392 = vpop.f32.mrb[0].mxu0
    %v393 = vadd.f32 0.0, %v392
    %v394 = vpop.f32.mrb[0].mxu0
    %v395 = vpop.f32.mrb[0].mxu0
    %v396 = vpop.f32.mrb[0].mxu0
    %397 = vdwg.mxu0
    %v398 = vadd.f32 %v356, %v393
    %v399 = vtanh.pop %v398
    %s400 = sadd.s32 %s68, 4
    %v401 = vstv %s400
    %vm402 = vcmp.le.s32.totalorder %v401, %v70
    %v403 = vsel %vm402, 1, 0
    %404 = vset.pattern.permute.xlu0 0
    %405 = vperm.xlu0 %404, %v403
    %v406 = vpop.permute.xlu0 %405
    %vm407 = vcmp.eq.s32.totalorder %v406, 1
    %v408 = vsel %vm407, %v399, %v353
    %s409 = scalar_lea.vmem [#allocation3], 20
    %v410 = vld [vmem:[%s409] sm:$0xf]
    %v411 = vunpack.c.l.bf16 %v410
    %v412 = vpack.c.bf16 %v408, %v408
    %413 = vmatprep.subr.bf16.mxu0 0
    %414 = vmatpush1.bf16.msra.mxu0 %v123
    %415 = vmatprep.subr.bf16.mxu0 0
    %416 = vmatpush1.bf16.msra.mxu0 %v124
    %417 = vmatprep.subr.bf16.mxu0 0
    %418 = vmatpush1.bf16.msra.mxu0 %v125
    %419 = vmatprep.subr.bf16.mxu0 0
    %420 = vmatpush1.bf16.msra.mxu0 %v126
    %421 = vmatprep.subr.bf16.mxu0 0
    %422 = vmatpush1.bf16.msra.mxu0 %v127
    %423 = vmatprep.subr.bf16.mxu0 0
    %424 = vmatpush1.bf16.msra.mxu0 %v128
    %425 = vmatprep.subr.bf16.mxu0 0
    %426 = vmatpush1.bf16.msra.mxu0 %v129
    %427 = vmatprep.subr.bf16.mxu0 0
    %428 = vmatpush1.bf16.msra.mxu0 %v130
    %429 = vmatprep.subr.bf16.mxu0 0
    %430 = vmatpush1.bf16.msra.mxu0 0
    %431 = vmatprep.subr.bf16.mxu0 0
    %432 = vmatpush1.bf16.msra.mxu0 0
    %433 = vmatprep.subr.bf16.mxu0 0
    %434 = vmatpush1.bf16.msra.mxu0 0
    %435 = vmatprep.subr.bf16.mxu0 0
    %436 = vmatpush1.bf16.msra.mxu0 0
    %437 = vmatprep.subr.bf16.mxu0 0
    %438 = vmatpush1.bf16.msra.mxu0 0
    %439 = vmatprep.subr.bf16.mxu0 0
    %440 = vmatpush1.bf16.msra.mxu0 0
    %441 = vmatprep.subr.bf16.mxu0 0
    %442 = vmatpush1.bf16.msra.mxu0 0
    %443 = vmatprep.subr.bf16.mxu0 0
    %444 = vmatpush1.bf16.msra.mxu0 0
    %445 = vmatprep.mubr.bf16.mxu0 0
    %446 = vmatmul.mubr.bf16.gmra.mrb[0].mxu0 %v412
    %v447 = vpop.f32.mrb[0].mxu0
    %v448 = vadd.f32 0.0, %v447
    %v449 = vpop.f32.mrb[0].mxu0
    %v450 = vpop.f32.mrb[0].mxu0
    %v451 = vpop.f32.mrb[0].mxu0
    %452 = vdwg.mxu0
    %v453 = vadd.f32 %v411, %v448
    %v454 = vtanh.pop %v453
    %s455 = sadd.s32 %s68, 5
    %v456 = vstv %s455
    %vm457 = vcmp.le.s32.totalorder %v456, %v70
    %v458 = vsel %vm457, 1, 0
    %459 = vset.pattern.permute.xlu0 0
    %460 = vperm.xlu0 %459, %v458
    %v461 = vpop.permute.xlu0 %460
    %vm462 = vcmp.eq.s32.totalorder %v461, 1
    %v463 = vsel %vm462, %v454, %v408
    %s464 = scalar_lea.vmem [#allocation3], 24
    %v465 = vld [vmem:[%s464] sm:$0xf]
    %v466 = vunpack.c.l.bf16 %v465
    %v467 = vpack.c.bf16 %v463, %v463
    %468 = vmatprep.subr.bf16.mxu0 0
    %469 = vmatpush1.bf16.msra.mxu0 %v123
    %470 = vmatprep.subr.bf16.mxu0 0
    %471 = vmatpush1.bf16.msra.mxu0 %v124
    %472 = vmatprep.subr.bf16.mxu0 0
    %473 = vmatpush1.bf16.msra.mxu0 %v125
    %474 = vmatprep.subr.bf16.mxu0 0
    %475 = vmatpush1.bf16.msra.mxu0 %v126
    %476 = vmatprep.subr.bf16.mxu0 0
    %477 = vmatpush1.bf16.msra.mxu0 %v127
    %478 = vmatprep.subr.bf16.mxu0 0
    %479 = vmatpush1.bf16.msra.mxu0 %v128
    %480 = vmatprep.subr.bf16.mxu0 0
    %481 = vmatpush1.bf16.msra.mxu0 %v129
    %482 = vmatprep.subr.bf16.mxu0 0
    %483 = vmatpush1.bf16.msra.mxu0 %v130
    %484 = vmatprep.subr.bf16.mxu0 0
    %485 = vmatpush1.bf16.msra.mxu0 0
    %486 = vmatprep.subr.bf16.mxu0 0
    %487 = vmatpush1.bf16.msra.mxu0 0
    %488 = vmatprep.subr.bf16.mxu0 0
    %489 = vmatpush1.bf16.msra.mxu0 0
    %490 = vmatprep.subr.bf16.mxu0 0
    %491 = vmatpush1.bf16.msra.mxu0 0
    %492 = vmatprep.subr.bf16.mxu0 0
    %493 = vmatpush1.bf16.msra.mxu0 0
    %494 = vmatprep.subr.bf16.mxu0 0
    %495 = vmatpush1.bf16.msra.mxu0 0
    %496 = vmatprep.subr.bf16.mxu0 0
    %497 = vmatpush1.bf16.msra.mxu0 0
    %498 = vmatprep.subr.bf16.mxu0 0
    %499 = vmatpush1.bf16.msra.mxu0 0
    %500 = vmatprep.mubr.bf16.mxu0 0
    %501 = vmatmul.mubr.bf16.gmra.mrb[0].mxu0 %v467
    %v502 = vpop.f32.mrb[0].mxu0
    %v503 = vadd.f32 0.0, %v502
    %v504 = vpop.f32.mrb[0].mxu0
    %v505 = vpop.f32.mrb[0].mxu0
    %v506 = vpop.f32.mrb[0].mxu0
    %507 = vdwg.mxu0
    %v508 = vadd.f32 %v466, %v503
    %v509 = vtanh.pop %v508
    %s510 = sadd.s32 %s68, 6
    %v511 = vstv %s510
    %vm512 = vcmp.le.s32.totalorder %v511, %v70
    %v513 = vsel %vm512, 1, 0
    %514 = vset.pattern.permute.xlu0 0
    %515 = vperm.xlu0 %514, %v513
    %v516 = vpop.permute.xlu0 %515
    %vm517 = vcmp.eq.s32.totalorder %v516, 1
    %v518 = vsel %vm517, %v509, %v463
    %s519 = scalar_lea.vmem [#allocation3], 28
    %v520 = vld [vmem:[%s519] sm:$0xf]
    %v521 = vunpack.c.l.bf16 %v520
    %v522 = vpack.c.bf16 %v518, %v518
    %523 = vmatprep.subr.bf16.mxu0 0
    %524 = vmatpush1.bf16.msra.mxu0 %v123
    %525 = vmatprep.subr.bf16.mxu0 0
    %526 = vmatpush1.bf16.msra.mxu0 %v124
    %527 = vmatprep.subr.bf16.mxu0 0
    %528 = vmatpush1.bf16.msra.mxu0 %v125
    %529 = vmatprep.subr.bf16.mxu0 0
    %530 = vmatpush1.bf16.msra.mxu0 %v126
    %531 = vmatprep.subr.bf16.mxu0 0
    %532 = vmatpush1.bf16.msra.mxu0 %v127
    %533 = vmatprep.subr.bf16.mxu0 0
    %534 = vmatpush1.bf16.msra.mxu0 %v128
    %535 = vmatprep.subr.bf16.mxu0 0
    %536 = vmatpush1.bf16.msra.mxu0 %v129
    %537 = vmatprep.subr.bf16.mxu0 0
    %538 = vmatpush1.bf16.msra.mxu0 %v130
    %539 = vmatprep.subr.bf16.mxu0 0
    %540 = vmatpush1.bf16.msra.mxu0 0
    %541 = vmatprep.subr.bf16.mxu0 0
    %542 = vmatpush1.bf16.msra.mxu0 0
    %543 = vmatprep.subr.bf16.mxu0 0
    %544 = vmatpush1.bf16.msra.mxu0 0
    %545 = vmatprep.subr.bf16.mxu0 0
    %546 = vmatpush1.bf16.msra.mxu0 0
    %547 = vmatprep.subr.bf16.mxu0 0
    %548 = vmatpush1.bf16.msra.mxu0 0
    %549 = vmatprep.subr.bf16.mxu0 0
    %550 = vmatpush1.bf16.msra.mxu0 0
    %551 = vmatprep.subr.bf16.mxu0 0
    %552 = vmatpush1.bf16.msra.mxu0 0
    %553 = vmatprep.subr.bf16.mxu0 0
    %554 = vmatpush1.bf16.msra.mxu0 0
    %555 = vmatprep.mubr.bf16.mxu0 0
    %556 = vmatmul.mubr.bf16.gmra.mrb[0].mxu0 %v522
    %v557 = vpop.f32.mrb[0].mxu0
    %v558 = vadd.f32 0.0, %v557
    %v559 = vpop.f32.mrb[0].mxu0
    %v560 = vpop.f32.mrb[0].mxu0
    %v561 = vpop.f32.mrb[0].mxu0
    %562 = vdwg.mxu0
    %v563 = vadd.f32 %v521, %v558
    %v564 = vtanh.pop %v563
    %s565 = sadd.s32 %s68, 7
    %v566 = vstv %s565
    %vm567 = vcmp.le.s32.totalorder %v566, %v70
    %v568 = vsel %vm567, 1, 0
    %569 = vset.pattern.permute.xlu0 0
    %570 = vperm.xlu0 %569, %v568
    %v571 = vpop.permute.xlu0 %570
    %vm572 = vcmp.eq.s32.totalorder %v571, 1
    %v573 = vsel %vm572, %v564, %v518
    %574 = vst [vmem:[#allocation2] sm:$0xff] %v573
    // Predicated region
    $region38: #{tpu_custom_call.1} parent=1 // pred_check
      %p575 = pneg %p63
    $region39: #{tpu_custom_call.1} parent=1 // pred_check_branch
      %577 = sbr.rel (%p575) target = $region41
    $region40: #{tpu_custom_call.1} parent=1 // pred_region
      %v578 = vpack.c.bf16 %v573, %v573
      %v579 = vld [vmem:[#allocation8] sm:$0xf]
      %v580 = vld [vmem:[#allocation8 + $0x4] sm:$0xf]
      %v581 = vld [vmem:[#allocation8 + $0x8] sm:$0xf]
      %v582 = vld [vmem:[#allocation8 + $0xc] sm:$0xf]
      %v583 = vld [vmem:[#allocation8 + $0x10] sm:$0xf]
      %v584 = vld [vmem:[#allocation8 + $0x14] sm:$0xf]
      %v585 = vld [vmem:[#allocation8 + $0x18] sm:$0xf]
      %v586 = vld [vmem:[#allocation8 + $0x1c] sm:$0xf]
      %v587 = vld [vmem:[#allocation8 + $0x20] sm:$0xf]
      %v588 = vld [vmem:[#allocation8 + $0x24] sm:$0xf]
      %v589 = vld [vmem:[#allocation8 + $0x28] sm:$0xf]
      %v590 = vld [vmem:[#allocation8 + $0x2c] sm:$0xf]
      %v591 = vld [vmem:[#allocation8 + $0x30] sm:$0xf]
      %v592 = vld [vmem:[#allocation8 + $0x34] sm:$0xf]
      %v593 = vld [vmem:[#allocation8 + $0x38] sm:$0xf]
      %v594 = vld [vmem:[#allocation8 + $0x3c] sm:$0xf]
      %v595 = vld [vmem:[%s4] sm:$0x1]
      %v597 = vlaneseq
      %v598 = vshrl.u32 %v597, 7
      %v599 = vsub.s32 0, %v598
      %v600 = vrot.slane %v595, %v599
      %v618 = vunpack.c.l.b16 %v579
      %v619 = vunpack.c.l.b16 %v580
      %v620 = vunpack.c.l.b16 %v581
      %v621 = vunpack.c.l.b16 %v582
      %v622 = vunpack.c.l.b16 %v583
      %v623 = vunpack.c.l.b16 %v584
      %v624 = vunpack.c.l.b16 %v585
      %v625 = vunpack.c.l.b16 %v586
      %v626 = vunpack.c.l.b16 %v587
      %v627 = vunpack.c.l.b16 %v588
      %v628 = vunpack.c.l.b16 %v589
      %v629 = vunpack.c.l.b16 %v590
      %v630 = vunpack.c.l.b16 %v591
      %v631 = vunpack.c.l.b16 %v592
      %v632 = vunpack.c.l.b16 %v593
      %v633 = vunpack.c.l.b16 %v594
      %v634 = vpack.c.b16 %v619, %v618
      %v635 = vpack.c.b16 %v621, %v620
      %v636 = vpack.c.b16 %v623, %v622
      %v637 = vpack.c.b16 %v625, %v624
      %v638 = vpack.c.b16 %v627, %v626
      %v639 = vpack.c.b16 %v629, %v628
      %v640 = vpack.c.b16 %v631, %v630
      %v641 = vpack.c.b16 %v633, %v632
      %650 = vmatprep.subr.bf16.mxu0 0
      %651 = vmatpush1.bf16.msra.mxu0 %v634
      %652 = vmatprep.subr.bf16.mxu0 0
      %653 = vmatpush1.bf16.msra.mxu0 %v635
      %654 = vmatprep.subr.bf16.mxu0 0
      %655 = vmatpush1.bf16.msra.mxu0 %v636
      %656 = vmatprep.subr.bf16.mxu0 0
      %657 = vmatpush1.bf16.msra.mxu0 %v637
      %658 = vmatprep.subr.bf16.mxu0 0
      %659 = vmatpush1.bf16.msra.mxu0 %v638
      %660 = vmatprep.subr.bf16.mxu0 0
      %661 = vmatpush1.bf16.msra.mxu0 %v639
      %662 = vmatprep.subr.bf16.mxu0 0
      %663 = vmatpush1.bf16.msra.mxu0 %v640
      %664 = vmatprep.subr.bf16.mxu0 0
      %665 = vmatpush1.bf16.msra.mxu0 %v641
      %666 = vmatprep.subr.bf16.mxu0 0
      %667 = vmatpush1.bf16.msra.mxu0 0
      %668 = vmatprep.subr.bf16.mxu0 0
      %669 = vmatpush1.bf16.msra.mxu0 0
      %670 = vmatprep.subr.bf16.mxu0 0
      %671 = vmatpush1.bf16.msra.mxu0 0
      %672 = vmatprep.subr.bf16.mxu0 0
      %673 = vmatpush1.bf16.msra.mxu0 0
      %674 = vmatprep.subr.bf16.mxu0 0
      %675 = vmatpush1.bf16.msra.mxu0 0
      %676 = vmatprep.subr.bf16.mxu0 0
      %677 = vmatpush1.bf16.msra.mxu0 0
      %678 = vmatprep.subr.bf16.mxu0 0
      %679 = vmatpush1.bf16.msra.mxu0 0
      %680 = vmatprep.subr.bf16.mxu0 0
      %681 = vmatpush1.bf16.msra.mxu0 0
      %682 = vmatprep.mubr.bf16.mxu0 0
      %683 = vmatmul.mubr.bf16.gmra.mrb[0].mxu0 %v578
      %v684 = vpop.f32.mrb[0].mxu0
      %v685 = vadd.f32 %v600, %v684
      %v686 = vpop.f32.mrb[0].mxu0
      %v687 = vpop.f32.mrb[0].mxu0
      %v688 = vpop.f32.mrb[0].mxu0
      %689 = vdwg.mxu0
      %690 = vst [vmem:[#allocation9] sm:$0xff] %v685
    $region41: #{tpu_custom_call.1} parent=1 // pred_fallthru
      _
    // Predicated region
    $region42: #{tpu_custom_call.1} parent=1 // pred_check
      _
    $region43: #{tpu_custom_call.1} parent=1 // pred_check_branch
      %692 = sbr.rel (0) target = $region45
    $region44: #{tpu_custom_call.1} parent=1 // pred_region
      %s694 = ssub.s32 128, 128
      %695 = vsyncadd [#allocation5], %s694
      %s697 = sshll.u32 [#allocation9], 4
      %s698 = int_to_ptr.vmem [resolvable:$true] %s697
      %700 = dma.vmem_to_hbm [thread:$0]  %s698, 128, %s5, [#allocation5]
    $region45: #{tpu_custom_call.1} parent=1 // pred_fallthru
      _
    // Predicated region
    $region46: #{tpu_custom_call.1} parent=1 // pred_check
      _
    $region47: #{tpu_custom_call.1} parent=1 // pred_check_branch
      %702 = sbr.rel (0) target = $region49
    $region48: #{tpu_custom_call.1} parent=1 // pred_region
      %703 = dma.done [#allocation5], 128
    $region49: #{tpu_custom_call.1} parent=1 // pred_fallthru
      _
    %704 = vsyncpa [#allocation4], 1
    %705 = vsyncpa [#allocation7], 1
    %706 = vsyncpa [#allocation5], 1

</llo_original>
